<compile_context>
chip_gen: v7x
topology: tpu7x:2x2x1
jax: 0.10.0
libtpu: 0.0.40
codegen_flags: <defaults>
</compile_context>

<pallas_src>
import functools

import jax
import jax.numpy as jnp
from jax import lax
from jax.experimental import pallas as pl
from jax.experimental.pallas import tpu as pltpu


def _round_up(x, m):
    return (x + m - 1) // m * m


def _pick_col_tile(cp):
    """Largest output-channel tile (multiple of 128 dividing cp) whose bf16
    weight block (3*cp, 2*tile) is <= ~4 MiB, so two weight buffers plus the
    f32 temporaries fit v7x's 64 MiB VMEM at production size (cp = 1152)."""
    best = 128
    t = 128
    while t <= cp:
        if cp % t == 0 and (3 * cp) * (2 * t) * 2 <= 4 * 1024 * 1024:
            best = t
        t += 128
    return best


def _vmem_limit_bytes():
    """Generation-dependent VMEM limit: ~80% of physical, capped at 100 MiB
    (v5e/v6e: 128 MiB physical, v7x: 64 MiB physical)."""
    phys = 128 * 1024 * 1024
    try:
        phys = int(pltpu.get_tpu_info().vmem_capacity_bytes)
    except Exception:
        pass
    return max(32 * 1024 * 1024, min(int(phys * 0.8), 100 * 1024 * 1024))


def _fused_kernel(x_hbm, w_ref, b_ref, o_hbm, act_ref, xcat_ref, *,
                  seq_len, pad_len, n_batch, num_layers, n_col_tiles,
                  col_width, cp):
    """Grid step (layer, col_tile) of the fused GatedResnet1d stack.

    x_hbm    : (n_tiles, M, tc) f32 HBM (memory_space=ANY), M = n_batch*pad_len
    w_ref    : (1, 3*cp, 2*tc)  bf16 weight tile (taps stacked along rows,
                                value/gate columns interleaved per tile)
    b_ref    : (1, 1, 2*tc)     f32 bias tile
    o_hbm    : (n_tiles, M, tc) f32 HBM output (memory_space=ANY)
    act_ref  : (n_tiles, M, tc) f32 VMEM   running activation (cross-layer)
    xcat_ref : (M, 3*cp)        bf16 VMEM  per-layer [x_{t-1}|x_t|x_{t+1}]
    """
    layer = pl.program_id(0)
    col = pl.program_id(1)
    n_rows = n_batch * pad_len

    # Layer 0: pull the whole padded activation HBM -> VMEM once (no
    # auto-pipelined input block => no extra resident double buffer).
    @pl.when(jnp.logical_and(layer == 0, col == 0))
    def _load_input():
        pltpu.sync_copy(x_hbm, act_ref)

    # Once per layer (col tile 0): snapshot the three conv taps in bf16.
    # The k=3 halo uses non-negative pltpu.roll (XLU sublane rotate); batch
    # boundary / edge rows are masked to reproduce Conv1d(padding=1) zero
    # padding across the flattened (batch*length) row axis.  Trailing padded
    # rows/channels are never read by real rows (their taps are masked) and
    # are sliced away on the host, so no trailing-row mask is needed.
    @pl.when(col == 0)
    def _snapshot():
        row = lax.broadcasted_iota(jnp.int32, (n_rows, col_width), 0)
        is_first = row == 0
        is_last = row == (seq_len - 1)
        for bi in range(1, n_batch):
            is_first = jnp.logical_or(is_first, row == bi * pad_len)
            is_last = jnp.logical_or(is_last,
                                     row == bi * pad_len + seq_len - 1)
        for c in range(n_col_tiles):
            lo = c * col_width
            hi = lo + col_width
            xf = act_ref[c]                                    # (M, tc) f32
            # rolls kept in f32 for robust lowering on all generations
            x_prev = jnp.where(is_first, 0.0,
                               pltpu.roll(xf, shift=1, axis=0))          # x[t-1]
            x_next = jnp.where(is_last, 0.0,
                               pltpu.roll(xf, shift=n_rows - 1, axis=0))  # x[t+1]
            xcat_ref[:, lo:hi] = x_prev.astype(jnp.bfloat16)
            xcat_ref[:, cp + lo:cp + hi] = xf.astype(jnp.bfloat16)
            xcat_ref[:, 2 * cp + lo:2 * cp + hi] = x_next.astype(jnp.bfloat16)

    # Conv1d(k=3) for this output-channel tile as ONE bf16 MXU matmul with
    # f32 accumulation: (M, 3*cp) @ (3*cp, 2*tc).  Value/gate columns are
    # pre-interleaved per tile, so the split below is lane aligned.
    h = jnp.dot(xcat_ref[...], w_ref[0], preferred_element_type=jnp.float32)
    h = h + b_ref[0]
    a = h[:, :col_width]
    g = h[:, col_width:]
    # In-place residual update of this tile's channels (the matmul reads the
    # pre-layer snapshot in xcat_ref, so in-place is safe across col tiles).
    act_ref[col] = act_ref[col] + jnp.tanh(a) * jax.nn.sigmoid(g)

    # Last layer: stream the finished tile straight back to HBM.
    @pl.when(layer == num_layers - 1)
    def _store_output():
        pltpu.sync_copy(act_ref.at[col], o_hbm.at[col])


def gated_resnet1d_transformer(x_ncl, w_stack, b_stack):
    """Fused forward pass of the GatedResnet1d stack.

    x_ncl   : (N, C, L) float32                       -- PyTorch NCL layout
    w_stack : (num_layers, 3*Cp, 2*Cp) bfloat16       -- packed, see init_params
    b_stack : (num_layers, 1, 2*Cp) float32
    Returns (N, C, L) float32.
    """
    N, C, L = x_ncl.shape
    num_layers = w_stack.shape[0]
    cp = w_stack.shape[2] // 2
    assert w_stack.shape[1] == 3 * cp
    assert b_stack.shape == (num_layers, 1, 2 * cp)

    tc = _pick_col_tile(cp)
    n_tiles = cp // tc
    lp = _round_up(max(L, 16), 16)           # multiple of 16 for bf16 sublanes
    m = N * lp

    # NCL -> (col_tile, rows, tile_channels): channels ride the 128-lane axis;
    # batch is flattened into the matmul M dimension so each layer's weights
    # are DMA'd once per forward pass, not once per batch element.
    x = jnp.transpose(x_ncl, (0, 2, 1)).astype(jnp.float32)      # (N, L, C)
    x = jnp.pad(x, ((0, 0), (0, lp - L), (0, cp - C)))           # (N, Lp, Cp)
    x = x.reshape(m, n_tiles, tc).transpose(1, 0, 2)             # (T, M, tc)

    kernel = functools.partial(
        _fused_kernel, seq_len=L, pad_len=lp, n_batch=N,
        num_layers=num_layers, n_col_tiles=n_tiles, col_width=tc, cp=cp)

    out = pl.pallas_call(
        kernel,
        out_shape=jax.ShapeDtypeStruct((n_tiles, m, tc), jnp.float32),
        grid_spec=pltpu.PrefetchScalarGridSpec(
            num_scalar_prefetch=0,
            grid=(num_layers, n_tiles),          # layer outer, channel tile inner
            in_specs=[
                # Input activation stays in HBM; one manual DMA at layer 0.
                pl.BlockSpec(memory_space=pl.ANY),
                # Per-(layer, col-tile) weight/bias blocks: default double
                # buffering prefetches the next tile's weights during compute.
                pl.BlockSpec((1, 3 * cp, 2 * tc), lambda l, c: (l, 0, c)),
                pl.BlockSpec((1, 1, 2 * tc), lambda l, c: (l, 0, c)),
            ],
            # Output stays in HBM; manual DMA per tile at the last layer.
            out_specs=pl.BlockSpec(memory_space=pl.ANY),
            scratch_shapes=[
                pltpu.VMEM((n_tiles, m, tc), jnp.float32),   # running activation
                pltpu.VMEM((m, 3 * cp), jnp.bfloat16),       # per-layer tap snapshot
            ],
        ),
        compiler_params=pltpu.CompilerParams(
            dimension_semantics=("arbitrary", "arbitrary"),
            vmem_limit_bytes=_vmem_limit_bytes(),
        ),
    )(x, w_stack, b_stack)

    out = out.transpose(1, 0, 2).reshape(N, lp, cp)[:, :L, :C]
    return jnp.transpose(out, (0, 2, 1))


def init_params(key, num_layers, nc, cp, col_tile):
    """Per-layer Conv1d(nc, 2*nc, k=3) params, packed & padded for the kernel.

    Packed weight (3*cp, 2*cp) bf16: rows = [tap t-1 | tap t | tap t+1] over
    (padded) input channels; columns = per output-channel tile, interleaved
    [value tile_c | gate tile_c], so the in-kernel split h[:, :tc] / h[:, tc:]
    is lane aligned.  Padded rows/columns are zero, so padded lanes stay zero.
    Also returns the unpadded f32 params for the pure-JAX reference.
    """
    n_tiles = cp // col_tile
    fan_in = nc * 3
    scale = 1.0 / float(fan_in) ** 0.5
    ws, bs, ref_params = [], [], []
    for i in range(num_layers):
        kw, kb = jax.random.split(jax.random.fold_in(key, i))
        w = jax.random.uniform(kw, (3, nc, 2 * nc), jnp.float32, -scale, scale)
        b = jax.random.uniform(kb, (2 * nc,), jnp.float32, -scale, scale)
        ref_params.append((w, b))

        val = jnp.zeros((3, cp, cp), jnp.float32).at[:, :nc, :nc].set(w[:, :, :nc])
        gate = jnp.zeros((3, cp, cp), jnp.float32).at[:, :nc, :nc].set(w[:, :, nc:])
        val = val.reshape(3 * cp, n_tiles, col_tile)
        gate = gate.reshape(3 * cp, n_tiles, col_tile)
        wp = jnp.stack([val, gate], axis=2).reshape(3 * cp, 2 * cp)

        bv = jnp.zeros((cp,), jnp.float32).at[:nc].set(b[:nc])
        bg = jnp.zeros((cp,), jnp.float32).at[:nc].set(b[nc:])
        bp = jnp.stack([bv.reshape(n_tiles, col_tile),
                        bg.reshape(n_tiles, col_tile)], axis=1).reshape(2 * cp)
        ws.append(wp)
        bs.append(bp)

    w_stack = jnp.stack(ws).astype(jnp.bfloat16)     # (layers, 3*cp, 2*cp)
    b_stack = jnp.stack(bs)[:, None, :]              # (layers, 1, 2*cp) f32
    return w_stack, b_stack, ref_params


def reference(x_ncl, ref_params):
    """Pure-JAX f32 reference matching the assumed GatedResnet1d stack."""
    x = x_ncl
    N, C, L = x.shape
    for w, b in ref_params:
        xp = jnp.pad(x, ((0, 0), (0, 0), (1, 1)))        # (N, C, L+2)
        h = (jnp.einsum("ncl,cd->ndl", xp[:, :, 0:L], w[0])
             + jnp.einsum("ncl,cd->ndl", xp[:, :, 1:L + 1], w[1])
             + jnp.einsum("ncl,cd->ndl", xp[:, :, 2:L + 2], w[2])
             + b[None, :, None])
        x = x + jnp.tanh(h[:, :C]) * jax.nn.sigmoid(h[:, C:])
    return x


if __name__ == "__main__":
    # Small shapes consistent with the module (original: nc=1025, 9 layers).
    NUM_TRANS_LAYERS = 9
    BATCH = 2
    NC = 16          # channels ("input_size", scaled down from 1025)
    LENGTH = 32      # sequence length

    key = jax.random.PRNGKey(0)
    kx, kp = jax.random.split(key)
    x = jax.random.normal(kx, (BATCH, NC, LENGTH), dtype=jnp.float32)   # NCL

    Cp = _round_up(max(NC, 128), 128)                 # 1025 -> 1152 at real size
    tc = _pick_col_tile(Cp)
    w_stack, b_stack, ref_params = init_params(kp, NUM_TRANS_LAYERS, NC, Cp, tc)

    out = gated_resnet1d_transformer(x, w_stack, b_stack)
    out = jax.block_until_ready(out)
    assert out.shape == x.shape and out.dtype == x.dtype

    ref = reference(x, ref_params)
    max_err = float(jnp.max(jnp.abs(out - ref)))
    assert max_err < 0.2, f"max abs error vs f32 reference: {max_err}"

    print("KERNEL_OK")
</pallas_src>

<mosaic_0001>
module attributes {stable_mosaic.version = 11 : i64} {
  func.func @_fused_kernel(%arg0: i32, %arg1: i32, %arg2: memref<1x64x128xf32, #tpu.memory_space<any>>, %arg3: memref<1x384x256xbf16, #tpu.memory_space<vmem>>, %arg4: memref<1x1x256xf32, #tpu.memory_space<vmem>>, %arg5: memref<1x64x128xf32, #tpu.memory_space<any>>, %arg6: memref<1x64x128xf32, #tpu.memory_space<vmem>>, %arg7: memref<64x384xbf16, #tpu.memory_space<vmem>>) attributes {dimension_semantics = [#tpu.dimension_semantics<arbitrary>, #tpu.dimension_semantics<arbitrary>], iteration_bounds = array<i64: 9, 1>, scalar_prefetch = 0 : i64, scratch_operands = 2 : i64, tpu.core_type = #tpu.core_type<tc>, window_params = [{}, {transform_indices = @transform_1, window_bounds = array<i64: 1, 384, 256>}, {transform_indices = @transform_2, window_bounds = array<i64: 1, 1, 256>}, {}]} {
    %c0_i32 = arith.constant 0 : i32
    %0 = arith.cmpi eq, %arg0, %c0_i32 : i32
    %c0_i32_0 = arith.constant 0 : i32
    %1 = arith.cmpi eq, %arg1, %c0_i32_0 : i32
    %2 = arith.andi %0, %1 : i1
    %3 = arith.extui %2 : i1 to i32
    %c0_i32_1 = arith.constant 0 : i32
    %4 = arith.cmpi ne, %3, %c0_i32_1 : i32
    scf.if %4 {
      "tpu.region"() ({
        %36 = tpu.sem_alloc : memref<!tpu.dma_semaphore, #tpu.memory_space<semaphore_mem>>
        tpu.enqueue_dma source(%arg2 : memref<1x64x128xf32, #tpu.memory_space<any>>) target(%arg6 : memref<1x64x128xf32, #tpu.memory_space<vmem>>) target_semaphore(%36 : memref<!tpu.dma_semaphore, #tpu.memory_space<semaphore_mem>>)
        tpu.wait_dma2 semaphore(%36 : memref<!tpu.dma_semaphore, #tpu.memory_space<semaphore_mem>>) src(%arg2 : memref<1x64x128xf32, #tpu.memory_space<any>>) dst(%arg6 : memref<1x64x128xf32, #tpu.memory_space<vmem>>)
        tpu.yield
      }) : () -> ()
    } else {
    }
    %c0_i32_2 = arith.constant 0 : i32
    %5 = arith.cmpi eq, %arg1, %c0_i32_2 : i32
    %6 = arith.extui %5 : i1 to i32
    %c0_i32_3 = arith.constant 0 : i32
    %7 = arith.cmpi ne, %6, %c0_i32_3 : i32
    scf.if %7 {
      %36 = tpu.iota {dimensions = array<i32: 0>} : vector<64x128xi32>
      %c0_i32_17 = arith.constant 0 : i32
      %37 = vector.broadcast %c0_i32_17 : i32 to vector<64x128xi32>
      %38 = arith.cmpi eq, %36, %37 : vector<64x128xi32>
      %c31_i32 = arith.constant 31 : i32
      %39 = vector.broadcast %c31_i32 : i32 to vector<64x128xi32>
      %40 = arith.cmpi eq, %36, %39 : vector<64x128xi32>
      %c32_i32 = arith.constant 32 : i32
      %41 = vector.broadcast %c32_i32 : i32 to vector<64x128xi32>
      %42 = arith.cmpi eq, %36, %41 : vector<64x128xi32>
      %43 = arith.ori %38, %42 : vector<64x128xi1>
      %c63_i32 = arith.constant 63 : i32
      %44 = vector.broadcast %c63_i32 : i32 to vector<64x128xi32>
      %45 = arith.cmpi eq, %36, %44 : vector<64x128xi32>
      %46 = arith.ori %40, %45 : vector<64x128xi1>
      %c0_18 = arith.constant 0 : index
      %c0_19 = arith.constant 0 : index
      %c0_20 = arith.constant 0 : index
      %47 = vector.load %arg6[%c0_18, %c0_19, %c0_20] : memref<1x64x128xf32, #tpu.memory_space<vmem>>, vector<1x64x128xf32>
      %48 = vector.shape_cast %47 : vector<1x64x128xf32> to vector<64x128xf32>
      %c1_i32 = arith.constant 1 : i32
      %49 = tpu.dynamic_rotate %48 by %c1_i32 dim 0 : vector<64x128xf32>, i32 -> vector<64x128xf32>
      %cst_21 = arith.constant 0.000000e+00 : f32
      %50 = vector.broadcast %cst_21 : f32 to vector<64x128xf32>
      %51 = arith.select %43, %50, %49 : vector<64x128xi1>, vector<64x128xf32>
      %c63_i32_22 = arith.constant 63 : i32
      %52 = tpu.dynamic_rotate %48 by %c63_i32_22 dim 0 : vector<64x128xf32>, i32 -> vector<64x128xf32>
      %cst_23 = arith.constant 0.000000e+00 : f32
      %53 = vector.broadcast %cst_23 : f32 to vector<64x128xf32>
      %54 = arith.select %46, %53, %52 : vector<64x128xi1>, vector<64x128xf32>
      %55 = arith.truncf %51 : vector<64x128xf32> to vector<64x128xbf16>
      %c0_24 = arith.constant 0 : index
      %c0_25 = arith.constant 0 : index
      %56 = vector.load %arg7[%c0_24, %c0_25] : memref<64x384xbf16, #tpu.memory_space<vmem>>, vector<64x128xbf16>
      tpu.vector_store %arg7[%c0_24, %c0_25], %55 {strides = array<i32>} : memref<64x384xbf16, #tpu.memory_space<vmem>>, vector<64x128xbf16>,
      %57 = arith.truncf %48 : vector<64x128xf32> to vector<64x128xbf16>
      %c0_26 = arith.constant 0 : index
      %c128 = arith.constant 128 : index
      %58 = vector.load %arg7[%c0_26, %c128] : memref<64x384xbf16, #tpu.memory_space<vmem>>, vector<64x128xbf16>
      tpu.vector_store %arg7[%c0_26, %c128], %57 {strides = array<i32>} : memref<64x384xbf16, #tpu.memory_space<vmem>>, vector<64x128xbf16>,
      %59 = arith.truncf %54 : vector<64x128xf32> to vector<64x128xbf16>
      %c0_27 = arith.constant 0 : index
      %c256 = arith.constant 256 : index
      %60 = vector.load %arg7[%c0_27, %c256] : memref<64x384xbf16, #tpu.memory_space<vmem>>, vector<64x128xbf16>
      tpu.vector_store %arg7[%c0_27, %c256], %59 {strides = array<i32>} : memref<64x384xbf16, #tpu.memory_space<vmem>>, vector<64x128xbf16>,
    } else {
    }
    %c0 = arith.constant 0 : index
    %c0_4 = arith.constant 0 : index
    %8 = vector.load %arg7[%c0, %c0_4] : memref<64x384xbf16, #tpu.memory_space<vmem>>, vector<64x384xbf16>
    %c0_5 = arith.constant 0 : index
    %c0_6 = arith.constant 0 : index
    %c0_7 = arith.constant 0 : index
    %9 = vector.load %arg3[%c0_5, %c0_6, %c0_7] : memref<1x384x256xbf16, #tpu.memory_space<vmem>>, vector<1x384x256xbf16>
    %10 = vector.shape_cast %9 : vector<1x384x256xbf16> to vector<384x256xbf16>
    %cst = arith.constant dense<0.000000e+00> : vector<64x256xf32>
    %11 = tpu.matmul %8, %10, %cst {dimension_numbers = #tpu.dot_dimension_numbers<[1], [0], [0], [1], [0, 0, 1, 1], [], []>} : vector<64x384xbf16>, vector<384x256xbf16>, vector<64x256xf32> -> vector<64x256xf32>
    %c0_8 = arith.constant 0 : index
    %c0_9 = arith.constant 0 : index
    %c0_10 = arith.constant 0 : index
    %12 = vector.load %arg4[%c0_8, %c0_9, %c0_10] : memref<1x1x256xf32, #tpu.memory_space<vmem>>, vector<1x1x256xf32>
    %13 = vector.shape_cast %12 : vector<1x1x256xf32> to vector<1x256xf32>
    %14 = vector.broadcast %13 : vector<1x256xf32> to vector<64x256xf32>
    %15 = arith.addf %11, %14 : vector<64x256xf32>
    %16 = vector.extract_strided_slice %15 {offsets = [0, 0], sizes = [64, 128], strides = [1, 1]} : vector<64x256xf32> to vector<64x128xf32>
    %17 = vector.extract_strided_slice %15 {offsets = [0, 128], sizes = [64, 128], strides = [1, 1]} : vector<64x256xf32> to vector<64x128xf32>
    %18 = arith.index_cast %arg1 : i32 to index
    %c0_11 = arith.constant 0 : index
    %c0_12 = arith.constant 0 : index
    %19 = vector.load %arg6[%18, %c0_11, %c0_12] : memref<1x64x128xf32, #tpu.memory_space<vmem>>, vector<1x64x128xf32>
    %20 = vector.shape_cast %19 : vector<1x64x128xf32> to vector<64x128xf32>
    %21 = math.tanh %16 : vector<64x128xf32>
    %22 = arith.negf %17 : vector<64x128xf32>
    %23 = math.exp %22 : vector<64x128xf32>
    %cst_13 = arith.constant 1.000000e+00 : f32
    %24 = vector.broadcast %cst_13 : f32 to vector<64x128xf32>
    %25 = arith.addf %24, %23 : vector<64x128xf32>
    %26 = arith.divf %24, %25 : vector<64x128xf32>
    %27 = arith.mulf %21, %26 : vector<64x128xf32>
    %28 = arith.addf %20, %27 : vector<64x128xf32>
    %29 = arith.index_cast %arg1 : i32 to index
    %c0_14 = arith.constant 0 : index
    %c0_15 = arith.constant 0 : index
    %30 = vector.load %arg6[%29, %c0_14, %c0_15] : memref<1x64x128xf32, #tpu.memory_space<vmem>>, vector<1x64x128xf32>
    %31 = vector.shape_cast %30 : vector<1x64x128xf32> to vector<64x128xf32>
    %32 = vector.shape_cast %28 : vector<64x128xf32> to vector<1x64x128xf32>
    tpu.vector_store %arg6[%29, %c0_14, %c0_15], %32 {strides = array<i32>} : memref<1x64x128xf32, #tpu.memory_space<vmem>>, vector<1x64x128xf32>,
    %c8_i32 = arith.constant 8 : i32
    %33 = arith.cmpi eq, %arg0, %c8_i32 : i32
    %34 = arith.extui %33 : i1 to i32
    %c0_i32_16 = arith.constant 0 : i32
    %35 = arith.cmpi ne, %34, %c0_i32_16 : i32
    scf.if %35 {
      "tpu.region"() ({
        %36 = tpu.sem_alloc : memref<!tpu.dma_semaphore, #tpu.memory_space<semaphore_mem>>
        %c0_i32_17 = arith.constant 0 : i32
        %c0_i32_18 = arith.constant 0 : i32
        %37 = tpu.memref_slice %arg6[%arg1, %c0_i32_17, %c0_i32_18] : memref<1x64x128xf32, #tpu.memory_space<vmem>> -> memref<1x64x128xf32, #tpu.memory_space<vmem>>
        %38 = tpu.memref_squeeze %37 : memref<1x64x128xf32, #tpu.memory_space<vmem>> -> memref<64x128xf32, #tpu.memory_space<vmem>>
        %c0_i32_19 = arith.constant 0 : i32
        %c0_i32_20 = arith.constant 0 : i32
        %39 = tpu.memref_slice %arg5[%arg1, %c0_i32_19, %c0_i32_20] : memref<1x64x128xf32, #tpu.memory_space<any>> -> memref<1x64x128xf32, #tpu.memory_space<any>>
        %40 = tpu.memref_squeeze %39 : memref<1x64x128xf32, #tpu.memory_space<any>> -> memref<64x128xf32, #tpu.memory_space<any>>
        tpu.enqueue_dma source(%38 : memref<64x128xf32, #tpu.memory_space<vmem>>) target(%40 : memref<64x128xf32, #tpu.memory_space<any>>) target_semaphore(%36 : memref<!tpu.dma_semaphore, #tpu.memory_space<semaphore_mem>>)
        %c0_i32_21 = arith.constant 0 : i32
        %c0_i32_22 = arith.constant 0 : i32
        %41 = tpu.memref_slice %arg6[%arg1, %c0_i32_21, %c0_i32_22] : memref<1x64x128xf32, #tpu.memory_space<vmem>> -> memref<1x64x128xf32, #tpu.memory_space<vmem>>
        %42 = tpu.memref_squeeze %41 : memref<1x64x128xf32, #tpu.memory_space<vmem>> -> memref<64x128xf32, #tpu.memory_space<vmem>>
        %c0_i32_23 = arith.constant 0 : i32
        %c0_i32_24 = arith.constant 0 : i32
        %43 = tpu.memref_slice %arg5[%arg1, %c0_i32_23, %c0_i32_24] : memref<1x64x128xf32, #tpu.memory_space<any>> -> memref<1x64x128xf32, #tpu.memory_space<any>>
        %44 = tpu.memref_squeeze %43 : memref<1x64x128xf32, #tpu.memory_space<any>> -> memref<64x128xf32, #tpu.memory_space<any>>
        tpu.wait_dma2 semaphore(%36 : memref<!tpu.dma_semaphore, #tpu.memory_space<semaphore_mem>>) src(%42 : memref<64x128xf32, #tpu.memory_space<vmem>>) dst(%44 : memref<64x128xf32, #tpu.memory_space<any>>)
        tpu.yield
      }) : () -> ()
    } else {
    }
    return
  }
  func.func @transform_1(%arg0: i32, %arg1: i32) -> (i32, i32, i32) {
    %c0_i32 = arith.constant 0 : i32
    %c0_i32_0 = arith.constant 0 : i32
    return %arg0, %c0_i32, %arg1 : i32, i32, i32
  }
  func.func @transform_2(%arg0: i32, %arg1: i32) -> (i32, i32, i32) {
    %c0_i32 = arith.constant 0 : i32
    %c0_i32_0 = arith.constant 0 : i32
    return %arg0, %c0_i32, %arg1 : i32, i32, i32
  }
}

</mosaic_0001>

<llo_original>
// kernel: tpu_custom_call.1
$region0: #{tpu_custom_call.1}
  #allocation0 [shape = 'u32[]', space=smem, size = 0x4, offset = 0x4, fixed_abs, tag = 'smem constant byte address 0x4 - core index']
  #allocation1 [shape = 'u32[144,128]{1,0:T(1,128)}', space=vmem, size = 0x12000, scoped, tag = 'internal scratch']
  #allocation2 [shape = 'f32[1,64,128]{2,1,0:T(8,128)}', space=vmem, size = 0x8000, scoped, tag = 'scratch operand']
  #allocation3 [shape = 'bf16[64,384]{1,0:T(16,128)(2,1)}', space=vmem, size = 0xc000, scoped, tag = 'scratch operand']
  #allocation9 [shape = 's32[]', space=sflag, size = 0x4, offset = 0, fixed_abs, tag = 'sflag constant byte address 0x0 - dummy sync flag']
  #allocation10 [shape = 's32[]', space=sflag, size = 0x4, offset = 0, fixed_abs, tag = 'sflag constant byte address 0x0 - dummy sync flag']
  #allocation11 [shape = 'u32[]', space=smem, size = 0x4, offset = 0x44, fixed_abs, tag = 'smem constant byte address 0x44 - assertion arg 0']
  #allocation12 [shape = 'u32[]', space=smem, size = 0x4, offset = 0x48, fixed_abs, tag = 'smem constant byte address 0x48 - assertion arg 1']
  #allocation14 [shape = 's32[]', space=sflag, size = 0x4, offset = 0, fixed_abs, tag = 'sflag constant byte address 0x0 - dummy sync flag']
  #allocation15 [shape = 's32[]', space=sflag, size = 0x4, offset = 0, fixed_abs, tag = 'sflag constant byte address 0x0 - dummy sync flag']
  %s0 = inlined_call_operand.hbm [shape: f32[1,64,128], index: 0, kind: input, shape index: {}]
  %s1 = inlined_call_operand.hbm [shape: bf16[9,384,256], index: 1, kind: input, shape index: {}]
  %s2 = inlined_call_operand.hbm [shape: f32[9,1,256], index: 2, kind: input, shape index: {}]
  %s3 = inlined_call_operand.hbm [shape: f32[1,64,128], index: 3, kind: output, shape index: {}]
  %s4 = sld [smem:[#allocation0]]
  $region59: #{tpu_custom_call.1} parent=0
    _
  %s6 = ssub.s32 1, %s4
  %s7 = scalar_select 0, %s6, %s4
  $region1: #{tpu_custom_call.1} parent=0
    #allocation4 [shape = 'u8[393216]{0}', space=vmem, size = 0x60000, scoped, tag = 'input window, operand 1']
    #allocation5 [shape = 's32[2]{0}', space=sflag, size = 0x8, scoped, tag = 'scoped memory for tpu_custom_call.1']
    #allocation6 [shape = 'u8[2048]{0}', space=vmem, size = 0x800, scoped, tag = 'input window, operand 2']
    #allocation7 [shape = 's32[2]{0}', space=sflag, size = 0x8, scoped, tag = 'scoped memory for tpu_custom_call.1']
    %8 = vsyncpa [#allocation5], 0
    %s9 = scalar_lea.sflag [#allocation5], 1
    %10 = vsyncpa %s9, 0
    %11 = vsyncpa [#allocation7], 0
    %s12 = scalar_lea.sflag [#allocation7], 1
    %13 = vsyncpa %s12, 0
    loop: start=0, step=1, limit=10
    $region2: #{tpu_custom_call.1} parent=1 // loop_pre_header
      _
    $region3: #{tpu_custom_call.1} parent=1 // loop_header
      %s15 = sphi 0, %s19
      %p16 = scmp.ge.s32.totalorder %s15, 10
      %s21 = sphi 0, %s31
      %s22 = sphi 0, %s27
      %s23 = sphi 0, %s21
      %s24 = sphi 0, %s22
      %s36 = sphi 0, %s38
      %s39 = sphi 0, %s36
      %s49 = sphi 0, %s39
      %s57 = sphi 0, %s59
      %s60 = sphi 0, %s57
      %s70 = sphi 0, %s60
    $region4: #{tpu_custom_call.1} parent=1 // loop_header_branch
      %18 = sbr.rel (%p16) target = $region8
    $region5: #{tpu_custom_call.1} parent=1 // loop_body
      %s20 = ssub.s32 %s15, 1
      %s25 = sadd.s32 1, %s22
      %p26 = scmp.ge.s32.totalorder %s25, 1
      %s27 = scalar_select %p26, 0, %s25
      %s28 = sadd.s32 1, %s21
      %s29 = scalar_select %p26, %s28, %s21
      %p30 = scmp.ge.s32.totalorder %s29, 9
      %s31 = scalar_select %p30, 0, %s29
      %s32 = ssub.s32 %s21, %s31
      %s33 = ssub.s32 %s22, %s27
      %s34 = sor.u32 %s32, %s33
      %p35 = scmp.eq.s32.totalorder %s34, 0
      %s37 = sadd.s32 %s36, 1
      %s38 = scalar_select %p35, %s36, %s37
      %p40 = pneg %p35
      %p41 = scmp.eq.s32.totalorder %s15, 8
      %p42 = por %p40, %p41
      %p43 = scmp.ne.s32.totalorder %s36, %s39
      %p44 = scmp.eq.s32.totalorder %s15, 0
      %p45 = por %p43, %p44
      %p46 = scmp.ne.s32.totalorder %s36, %s39
      %p47 = scmp.eq.s32.totalorder %s20, 8
      %p48 = por %p46, %p47
      %p50 = scmp.ne.s32.totalorder %s39, %s49
      %p51 = scmp.eq.s32.totalorder %s20, 0
      %p52 = por %p50, %p51
      %s53 = ssub.s32 %s21, %s31
      %s54 = ssub.s32 %s22, %s27
      %s55 = sor.u32 %s53, %s54
      %p56 = scmp.eq.s32.totalorder %s55, 0
      %s58 = sadd.s32 %s57, 1
      %s59 = scalar_select %p56, %s57, %s58
      %p61 = pneg %p56
      %p62 = scmp.eq.s32.totalorder %s15, 8
      %p63 = por %p61, %p62
      %p64 = scmp.ne.s32.totalorder %s57, %s60
      %p65 = scmp.eq.s32.totalorder %s15, 0
      %p66 = por %p64, %p65
      %p67 = scmp.ne.s32.totalorder %s57, %s60
      %p68 = scmp.eq.s32.totalorder %s20, 8
      %p69 = por %p67, %p68
      %p71 = scmp.ne.s32.totalorder %s60, %s70
      %p72 = scmp.eq.s32.totalorder %s20, 0
      %p73 = por %p71, %p72
      %p74 = scmp.le.s32.totalorder 1, %s15
      // Predicated region
      $region9: #{tpu_custom_call.1} parent=5 // pred_check
        %p75 = pneg %p74
      $region10: #{tpu_custom_call.1} parent=5 // pred_check_branch
        %77 = sbr.rel (%p75) target = $region12
      $region11: #{tpu_custom_call.1} parent=5 // pred_region
        %s78 = ssub.s32 %s15, 1
      $region12: #{tpu_custom_call.1} parent=5 // pred_fallthru
        _
      %p79 = scmp.lt.s32.totalorder %s15, 9
      // Predicated region
      $region13: #{tpu_custom_call.1} parent=5 // pred_check
        %p80 = pneg %p79
      $region14: #{tpu_custom_call.1} parent=5 // pred_check_branch
        %82 = sbr.rel (%p80) target = $region16
      $region15: #{tpu_custom_call.1} parent=5 // pred_region
        // Predicated region
        $region17: #{tpu_custom_call.1} parent=15 // pred_check
          %p83 = pneg %p45
        $region18: #{tpu_custom_call.1} parent=15 // pred_check_branch
          %85 = sbr.rel (%p83) target = $region20
        $region19: #{tpu_custom_call.1} parent=15 // pred_region
          %s86 = sand.u32 %s36, 1
          %s87 = scalar_lea.sflag [#allocation5], %s86
          %s88 = sand.u32 %s36, 1
          %s89 = smul.addr %s88, 384
          %s90 = scalar_lea.vmem [#allocation4], %s89
          %s91 = smul.u32 2, %s22
          %s93 = ssub.s32 6144, 6144
          %94 = vsyncadd %s87, %s93
          %s95 = smul.addr %s21, 96
          %s96 = sadd.s32 %s91, %s95
          %s97 = smul.addr %s96, 64
          %s98 = scalar_lea.hbm %s1, %s97
          %s99 = sshll.u32 %s90, 4
          %s100 = int_to_ptr.vmem [resolvable:$true] %s99
          %105 = dma.hbm_to_vmem [thread:$0]  %s98, 6144, %s100, %s87, 128, 128, 8
        $region20: #{tpu_custom_call.1} parent=15 // pred_fallthru
          _
        // Predicated region
        $region21: #{tpu_custom_call.1} parent=15 // pred_check
          %p106 = pneg %p66
        $region22: #{tpu_custom_call.1} parent=15 // pred_check_branch
          %108 = sbr.rel (%p106) target = $region24
        $region23: #{tpu_custom_call.1} parent=15 // pred_region
          %s109 = sand.u32 %s57, 1
          %s110 = scalar_lea.sflag [#allocation7], %s109
          %s111 = sand.u32 %s57, 1
          %s112 = smul.addr %s111, 2
          %s113 = scalar_lea.vmem [#allocation6], %s112
          %s114 = smul.u32 2, %s22
          %s116 = ssub.s32 32, 32
          %117 = vsyncadd %s110, %s116
          %s118 = smul.addr %s21, 2
          %s119 = sadd.s32 %s114, %s118
          %s120 = smul.addr %s119, 16
          %s121 = scalar_lea.hbm %s2, %s120
          %s123 = sshll.u32 %s113, 4
          %s124 = int_to_ptr.vmem [resolvable:$true] %s123
          %126 = dma.hbm_to_vmem [thread:$0]  %s121, 32, %s124, %s110
        $region24: #{tpu_custom_call.1} parent=15 // pred_fallthru
          _
      $region16: #{tpu_custom_call.1} parent=5 // pred_fallthru
        _
      %p127 = scmp.le.s32.totalorder 1, %s15
      // Predicated region
      $region25: #{tpu_custom_call.1} parent=5 // pred_check
        %p128 = pneg %p127
      $region26: #{tpu_custom_call.1} parent=5 // pred_check_branch
        %130 = sbr.rel (%p128) target = $region28
      $region27: #{tpu_custom_call.1} parent=5 // pred_region
        %s131 = ssub.s32 %s15, 1
        %s132 = sand.u32 %s39, 1
        %s133 = scalar_lea.sflag [#allocation5], %s132
        %s134 = sand.u32 %s39, 1
        %s135 = smul.addr %s134, 384
        %s136 = scalar_lea.vmem [#allocation4], %s135
        // Predicated region
        $region29: #{tpu_custom_call.1} parent=27 // pred_check
          %p137 = pneg %p52
        $region30: #{tpu_custom_call.1} parent=27 // pred_check_branch
          %139 = sbr.rel (%p137) target = $region32
        $region31: #{tpu_custom_call.1} parent=27 // pred_region
          %140 = dma.done %s133, 6144
        $region32: #{tpu_custom_call.1} parent=27 // pred_fallthru
          _
        %s141 = sand.u32 %s60, 1
        %s142 = scalar_lea.sflag [#allocation7], %s141
        %s143 = sand.u32 %s60, 1
        %s144 = smul.addr %s143, 2
        %s145 = scalar_lea.vmem [#allocation6], %s144
        // Predicated region
        $region33: #{tpu_custom_call.1} parent=27 // pred_check
          %p146 = pneg %p73
        $region34: #{tpu_custom_call.1} parent=27 // pred_check_branch
          %148 = sbr.rel (%p146) target = $region36
        $region35: #{tpu_custom_call.1} parent=27 // pred_region
          %149 = dma.done %s142, 32
        $region36: #{tpu_custom_call.1} parent=27 // pred_fallthru
          _
        %s150 = sand.u32 %s39, 1
        %s151 = scalar_lea.sflag [#allocation5], %s150
        %s152 = sand.u32 %s39, 1
        %s153 = smul.addr %s152, 384
        %s154 = scalar_lea.vmem [#allocation4], %s153
        %p155 = pneg %p52
        %p156 = pneg %p48
        %s157 = sand.u32 %s60, 1
        %s158 = scalar_lea.sflag [#allocation7], %s157
        %s159 = sand.u32 %s60, 1
        %s160 = smul.addr %s159, 2
        %s161 = scalar_lea.vmem [#allocation6], %s160
        %p162 = pneg %p73
        %p163 = pneg %p69
        %s164 = smul.u32 2, %s24
        %s165 = smul.u32 2, %s24
        %p167 = scmp.eq.s32.totalorder %s23, 0
        %p168 = scmp.eq.s32.totalorder %s24, 0
        %p169 = pnand %p167, %p168
        %p170 = pneg %p169
        // Predicated region
        $region37: #{tpu_custom_call.1} parent=27 // pred_check
          _
        $region38: #{tpu_custom_call.1} parent=27 // pred_check_branch
          %172 = sbr.rel (%p169) target = $region40
        $region39: #{tpu_custom_call.1} parent=27 // pred_region
          $region41: #{tpu_custom_call.1} parent=39
            #allocation8 [shape = 's32[1]{0}', space=sflag, size = 0x4, scoped, tag = 'scoped memory for tpu_custom_call.1']
            // Predicated region
            $region42: #{tpu_custom_call.1} parent=41 // pred_check
              _
            $region43: #{tpu_custom_call.1} parent=41 // pred_check_branch
              %174 = sbr.rel target = $region45
            $region44: #{tpu_custom_call.1} parent=41 // pred_region
              %175 = sst [smem:[#allocation11]] [#allocation10]
              %176 = sst [smem:[#allocation12]] [#allocation9]
            $region45: #{tpu_custom_call.1} parent=41 // pred_fallthru
              _
            %178 = shalt.err (0)
            %s180 = sshll.u32 [#allocation2], 4
            %s181 = int_to_ptr.vmem [resolvable:$true] %s180
            %183 = dma.hbm_to_vmem [thread:$0]  %s0, 1024, %s181, [#allocation8]
            %s184 = smul.u32 1, 64
            %s185 = smul.u32 %s184, 1
            %s186 = sshll.u32 %s185, 4
            %187 = dma.done [#allocation8], %s186
        $region40: #{tpu_custom_call.1} parent=27 // pred_fallthru
          _
        // Predicated region
        $region46: #{tpu_custom_call.1} parent=27 // pred_check
          %p188 = pneg %p168
        $region47: #{tpu_custom_call.1} parent=27 // pred_check_branch
          %190 = sbr.rel (%p188) target = $region49
        $region48: #{tpu_custom_call.1} parent=27 // pred_region
          %v191 = vlaneseq
          %v192 = vshrl.u32 %v191, 7
          %v193 = vadd.s32 %v192, 8
          %v194 = vadd.s32 %v192, 16
          %v195 = vadd.s32 %v192, 24
          %v196 = vadd.s32 %v192, 32
          %v197 = vadd.s32 %v192, 40
          %v198 = vadd.s32 %v192, 48
          %v199 = vadd.s32 %v192, 56
          %vm200 = vcmp.eq.s32.totalorder %v192, 0
          %vm201 = vcmp.eq.s32.totalorder %v193, 0
          %vm202 = vcmp.eq.s32.totalorder %v194, 0
          %vm203 = vcmp.eq.s32.totalorder %v195, 0
          %vm204 = vcmp.eq.s32.totalorder %v196, 0
          %vm205 = vcmp.eq.s32.totalorder %v197, 0
          %vm206 = vcmp.eq.s32.totalorder %v198, 0
          %vm207 = vcmp.eq.s32.totalorder %v199, 0
          %vm208 = vcmp.eq.s32.totalorder %v192, 31
          %vm209 = vcmp.eq.s32.totalorder %v193, 31
          %vm210 = vcmp.eq.s32.totalorder %v194, 31
          %vm211 = vcmp.eq.s32.totalorder %v195, 31
          %vm212 = vcmp.eq.s32.totalorder %v196, 31
          %vm213 = vcmp.eq.s32.totalorder %v197, 31
          %vm214 = vcmp.eq.s32.totalorder %v198, 31
          %vm215 = vcmp.eq.s32.totalorder %v199, 31
          %vm216 = vcmp.eq.s32.totalorder %v192, 32
          %vm217 = vcmp.eq.s32.totalorder %v193, 32
          %vm218 = vcmp.eq.s32.totalorder %v194, 32
          %vm219 = vcmp.eq.s32.totalorder %v195, 32
          %vm220 = vcmp.eq.s32.totalorder %v196, 32
          %vm221 = vcmp.eq.s32.totalorder %v197, 32
          %vm222 = vcmp.eq.s32.totalorder %v198, 32
          %vm223 = vcmp.eq.s32.totalorder %v199, 32
          %vm224 = vmor %vm200, %vm216
          %vm225 = vmor %vm201, %vm217
          %vm226 = vmor %vm202, %vm218
          %vm227 = vmor %vm203, %vm219
          %vm228 = vmor %vm204, %vm220
          %vm229 = vmor %vm205, %vm221
          %vm230 = vmor %vm206, %vm222
          %vm231 = vmor %vm207, %vm223
          %vm232 = vcmp.eq.s32.totalorder %v192, 63
          %vm233 = vcmp.eq.s32.totalorder %v193, 63
          %vm234 = vcmp.eq.s32.totalorder %v194, 63
          %vm235 = vcmp.eq.s32.totalorder %v195, 63
          %vm236 = vcmp.eq.s32.totalorder %v196, 63
          %vm237 = vcmp.eq.s32.totalorder %v197, 63
          %vm238 = vcmp.eq.s32.totalorder %v198, 63
          %vm239 = vcmp.eq.s32.totalorder %v199, 63
          %vm240 = vmor %vm208, %vm232
          %vm241 = vmor %vm209, %vm233
          %vm242 = vmor %vm210, %vm234
          %vm243 = vmor %vm211, %vm235
          %vm244 = vmor %vm212, %vm236
          %vm245 = vmor %vm213, %vm237
          %vm246 = vmor %vm214, %vm238
          %vm247 = vmor %vm215, %vm239
          %v248 = vld [vmem:[#allocation2] sm:$0xff]
          %v249 = vld [vmem:[#allocation2 + $0x8] sm:$0xff]
          %v250 = vld [vmem:[#allocation2 + $0x10] sm:$0xff]
          %v251 = vld [vmem:[#allocation2 + $0x18] sm:$0xff]
          %v252 = vld [vmem:[#allocation2 + $0x20] sm:$0xff]
          %v253 = vld [vmem:[#allocation2 + $0x28] sm:$0xff]
          %v254 = vld [vmem:[#allocation2 + $0x30] sm:$0xff]
          %v255 = vld [vmem:[#allocation2 + $0x38] sm:$0xff]
          %v256 = vrot.slane %v248, 7
          %v257 = vrot.slane %v249, 7
          %v258 = vrot.slane %v250, 7
          %v259 = vrot.slane %v251, 7
          %v260 = vrot.slane %v252, 7
          %v261 = vrot.slane %v253, 7
          %v262 = vrot.slane %v254, 7
          %v263 = vrot.slane %v255, 7
          %vm264 = vcmp.lt.s32.totalorder %v192, 1
          %v265 = vsel %vm264, %v262, %v263
          %v266 = vsel %vm264, %v261, %v262
          %v267 = vsel %vm264, %v260, %v261
          %v268 = vsel %vm264, %v259, %v260
          %v269 = vsel %vm264, %v258, %v259
          %v270 = vsel %vm264, %v257, %v258
          %v271 = vsel %vm264, %v256, %v257
          %v272 = vsel %vm264, %v263, %v256
          %v273 = vsel %vm224, 0.0, %v272
          %v274 = vsel %vm225, 0.0, %v271
          %v275 = vsel %vm226, 0.0, %v270
          %v276 = vsel %vm227, 0.0, %v269
          %v277 = vsel %vm228, 0.0, %v268
          %v278 = vsel %vm229, 0.0, %v267
          %v279 = vsel %vm230, 0.0, %v266
          %v280 = vsel %vm231, 0.0, %v265
          %v281 = vrot.slane %v248, 1
          %v282 = vrot.slane %v249, 1
          %v283 = vrot.slane %v250, 1
          %v284 = vrot.slane %v251, 1
          %v285 = vrot.slane %v252, 1
          %v286 = vrot.slane %v253, 1
          %v287 = vrot.slane %v254, 1
          %v288 = vrot.slane %v255, 1
          %vm289 = vcmp.lt.s32.totalorder %v192, 7
          %v290 = vsel %vm289, %v287, %v288
          %v291 = vsel %vm289, %v286, %v287
          %v292 = vsel %vm289, %v285, %v286
          %v293 = vsel %vm289, %v284, %v285
          %v294 = vsel %vm289, %v283, %v284
          %v295 = vsel %vm289, %v282, %v283
          %v296 = vsel %vm289, %v281, %v282
          %v297 = vsel %vm289, %v288, %v281
          %v298 = vsel %vm240, 0.0, %v296
          %v299 = vsel %vm241, 0.0, %v295
          %v300 = vsel %vm242, 0.0, %v294
          %v301 = vsel %vm243, 0.0, %v293
          %v302 = vsel %vm244, 0.0, %v292
          %v303 = vsel %vm245, 0.0, %v291
          %v304 = vsel %vm246, 0.0, %v290
          %v305 = vsel %vm247, 0.0, %v297
          %v306 = vpack.c.bf16 %v274, %v273
          %v307 = vpack.c.bf16 %v276, %v275
          %v308 = vpack.c.bf16 %v278, %v277
          %v309 = vpack.c.bf16 %v280, %v279
          %310 = vst [vmem:[#allocation3] sm:$0xff] %v306
          %311 = vst [vmem:[#allocation3 + $0x18] sm:$0xff] %v307
          %312 = vst [vmem:[#allocation3 + $0x30] sm:$0xff] %v308
          %313 = vst [vmem:[#allocation3 + $0x48] sm:$0xff] %v309
          %v314 = vpack.c.bf16 %v249, %v248
          %v315 = vpack.c.bf16 %v251, %v250
          %v316 = vpack.c.bf16 %v253, %v252
          %v317 = vpack.c.bf16 %v255, %v254
          %318 = vst [vmem:[#allocation3 + $0x8] sm:$0xff] %v314
          %319 = vst [vmem:[#allocation3 + $0x20] sm:$0xff] %v315
          %320 = vst [vmem:[#allocation3 + $0x38] sm:$0xff] %v316
          %321 = vst [vmem:[#allocation3 + $0x50] sm:$0xff] %v317
          %v322 = vpack.c.bf16 %v299, %v298
          %v323 = vpack.c.bf16 %v301, %v300
          %v324 = vpack.c.bf16 %v303, %v302
          %v325 = vpack.c.bf16 %v305, %v304
          %326 = vst [vmem:[#allocation3 + $0x10] sm:$0xff] %v322
          %327 = vst [vmem:[#allocation3 + $0x28] sm:$0xff] %v323
          %328 = vst [vmem:[#allocation3 + $0x40] sm:$0xff] %v324
          %329 = vst [vmem:[#allocation3 + $0x58] sm:$0xff] %v325
        $region49: #{tpu_custom_call.1} parent=27 // pred_fallthru
          _
        %v330 = vld [vmem:[#allocation3] sm:$0xff]
        %v331 = vld [vmem:[#allocation3 + $0x8] sm:$0xff]
        %v332 = vld [vmem:[#allocation3 + $0x10] sm:$0xff]
        %v333 = vld [vmem:[#allocation3 + $0x18] sm:$0xff]
        %v334 = vld [vmem:[#allocation3 + $0x20] sm:$0xff]
        %v335 = vld [vmem:[#allocation3 + $0x28] sm:$0xff]
        %v336 = vld [vmem:[#allocation3 + $0x30] sm:$0xff]
        %v337 = vld [vmem:[#allocation3 + $0x38] sm:$0xff]
        %v338 = vld [vmem:[#allocation3 + $0x40] sm:$0xff]
        %v339 = vld [vmem:[#allocation3 + $0x48] sm:$0xff]
        %v340 = vld [vmem:[#allocation3 + $0x50] sm:$0xff]
        %v341 = vld [vmem:[#allocation3 + $0x58] sm:$0xff]
        %v342 = vld [vmem:[%s136] sm:$0xff]
        %v343 = vld [vmem:[%s136 + $0x8] sm:$0xff]
        %v344 = vld [vmem:[%s136 + $0x10] sm:$0xff]
        %v345 = vld [vmem:[%s136 + $0x18] sm:$0xff]
        %v346 = vld [vmem:[%s136 + $0x20] sm:$0xff]
        %v347 = vld [vmem:[%s136 + $0x28] sm:$0xff]
        %v348 = vld [vmem:[%s136 + $0x30] sm:$0xff]
        %v349 = vld [vmem:[%s136 + $0x38] sm:$0xff]
        %v350 = vld [vmem:[%s136 + $0x40] sm:$0xff]
        %v351 = vld [vmem:[%s136 + $0x48] sm:$0xff]
        %v352 = vld [vmem:[%s136 + $0x50] sm:$0xff]
        %v353 = vld [vmem:[%s136 + $0x58] sm:$0xff]
        %v354 = vld [vmem:[%s136 + $0x60] sm:$0xff]
        %v355 = vld [vmem:[%s136 + $0x68] sm:$0xff]
        %v356 = vld [vmem:[%s136 + $0x70] sm:$0xff]
        %v357 = vld [vmem:[%s136 + $0x78] sm:$0xff]
        %v358 = vld [vmem:[%s136 + $0x80] sm:$0xff]
        %v359 = vld [vmem:[%s136 + $0x88] sm:$0xff]
        %v360 = vld [vmem:[%s136 + $0x90] sm:$0xff]
        %v361 = vld [vmem:[%s136 + $0x98] sm:$0xff]
        %v362 = vld [vmem:[%s136 + $0xa0] sm:$0xff]
        %v363 = vld [vmem:[%s136 + $0xa8] sm:$0xff]
        %v364 = vld [vmem:[%s136 + $0xb0] sm:$0xff]
        %v365 = vld [vmem:[%s136 + $0xb8] sm:$0xff]
        %v366 = vld [vmem:[%s136 + $0xc0] sm:$0xff]
        %v367 = vld [vmem:[%s136 + $0xc8] sm:$0xff]
        %v368 = vld [vmem:[%s136 + $0xd0] sm:$0xff]
        %v369 = vld [vmem:[%s136 + $0xd8] sm:$0xff]
        %v370 = vld [vmem:[%s136 + $0xe0] sm:$0xff]
        %v371 = vld [vmem:[%s136 + $0xe8] sm:$0xff]
        %v372 = vld [vmem:[%s136 + $0xf0] sm:$0xff]
        %v373 = vld [vmem:[%s136 + $0xf8] sm:$0xff]
        %v374 = vld [vmem:[%s136 + $0x100] sm:$0xff]
        %v375 = vld [vmem:[%s136 + $0x108] sm:$0xff]
        %v376 = vld [vmem:[%s136 + $0x110] sm:$0xff]
        %v377 = vld [vmem:[%s136 + $0x118] sm:$0xff]
        %v378 = vld [vmem:[%s136 + $0x120] sm:$0xff]
        %v379 = vld [vmem:[%s136 + $0x128] sm:$0xff]
        %v380 = vld [vmem:[%s136 + $0x130] sm:$0xff]
        %v381 = vld [vmem:[%s136 + $0x138] sm:$0xff]
        %v382 = vld [vmem:[%s136 + $0x140] sm:$0xff]
        %v383 = vld [vmem:[%s136 + $0x148] sm:$0xff]
        %v384 = vld [vmem:[%s136 + $0x150] sm:$0xff]
        %v385 = vld [vmem:[%s136 + $0x158] sm:$0xff]
        %v386 = vld [vmem:[%s136 + $0x160] sm:$0xff]
        %v387 = vld [vmem:[%s136 + $0x168] sm:$0xff]
        %v388 = vld [vmem:[%s136 + $0x170] sm:$0xff]
        %v389 = vld [vmem:[%s136 + $0x178] sm:$0xff]
        %v390 = vld [vmem:[%s145] sm:$0x3]
        %v392 = vlaneseq
        %v393 = vshrl.u32 %v392, 7
        %v394 = vsub.s32 0, %v393
        %v395 = vrot.slane %v390, %v394
        %v396 = vlaneseq
        %v397 = vshrl.u32 %v396, 7
        %v398 = vsub.s32 1, %v397
        %v399 = vrot.slane %v390, %v398
        %v450 = vunpack.c.l.b16 %v342
        %v451 = vunpack.c.h.b16 %v342
        %v452 = vunpack.c.l.b16 %v343
        %v453 = vunpack.c.h.b16 %v343
        %v454 = vunpack.c.l.b16 %v344
        %v455 = vunpack.c.h.b16 %v344
        %v456 = vunpack.c.l.b16 %v345
        %v457 = vunpack.c.h.b16 %v345
        %v458 = vunpack.c.l.b16 %v346
        %v459 = vunpack.c.h.b16 %v346
        %v460 = vunpack.c.l.b16 %v347
        %v461 = vunpack.c.h.b16 %v347
        %v462 = vunpack.c.l.b16 %v348
        %v463 = vunpack.c.h.b16 %v348
        %v464 = vunpack.c.l.b16 %v349
        %v465 = vunpack.c.h.b16 %v349
        %v466 = vunpack.c.l.b16 %v350
        %v467 = vunpack.c.h.b16 %v350
        %v468 = vunpack.c.l.b16 %v351
        %v469 = vunpack.c.h.b16 %v351
        %v470 = vunpack.c.l.b16 %v352
        %v471 = vunpack.c.h.b16 %v352
        %v472 = vunpack.c.l.b16 %v353
        %v473 = vunpack.c.h.b16 %v353
        %v474 = vunpack.c.l.b16 %v354
        %v475 = vunpack.c.h.b16 %v354
        %v476 = vunpack.c.l.b16 %v355
        %v477 = vunpack.c.h.b16 %v355
        %v478 = vunpack.c.l.b16 %v356
        %v479 = vunpack.c.h.b16 %v356
        %v480 = vunpack.c.l.b16 %v357
        %v481 = vunpack.c.h.b16 %v357
        %v482 = vunpack.c.l.b16 %v358
        %v483 = vunpack.c.h.b16 %v358
        %v484 = vunpack.c.l.b16 %v359
        %v485 = vunpack.c.h.b16 %v359
        %v486 = vunpack.c.l.b16 %v360
        %v487 = vunpack.c.h.b16 %v360
        %v488 = vunpack.c.l.b16 %v361
        %v489 = vunpack.c.h.b16 %v361
        %v490 = vunpack.c.l.b16 %v362
        %v491 = vunpack.c.h.b16 %v362
        %v492 = vunpack.c.l.b16 %v363
        %v493 = vunpack.c.h.b16 %v363
        %v494 = vunpack.c.l.b16 %v364
        %v495 = vunpack.c.h.b16 %v364
        %v496 = vunpack.c.l.b16 %v365
        %v497 = vunpack.c.h.b16 %v365
        %v498 = vunpack.c.l.b16 %v366
        %v499 = vunpack.c.h.b16 %v366
        %v500 = vunpack.c.l.b16 %v367
        %v501 = vunpack.c.h.b16 %v367
        %v502 = vunpack.c.l.b16 %v368
        %v503 = vunpack.c.h.b16 %v368
        %v504 = vunpack.c.l.b16 %v369
        %v505 = vunpack.c.h.b16 %v369
        %v506 = vunpack.c.l.b16 %v370
        %v507 = vunpack.c.h.b16 %v370
        %v508 = vunpack.c.l.b16 %v371
        %v509 = vunpack.c.h.b16 %v371
        %v510 = vunpack.c.l.b16 %v372
        %v511 = vunpack.c.h.b16 %v372
        %v512 = vunpack.c.l.b16 %v373
        %v513 = vunpack.c.h.b16 %v373
        %v514 = vunpack.c.l.b16 %v374
        %v515 = vunpack.c.h.b16 %v374
        %v516 = vunpack.c.l.b16 %v375
        %v517 = vunpack.c.h.b16 %v375
        %v518 = vunpack.c.l.b16 %v376
        %v519 = vunpack.c.h.b16 %v376
        %v520 = vunpack.c.l.b16 %v377
        %v521 = vunpack.c.h.b16 %v377
        %v522 = vunpack.c.l.b16 %v378
        %v523 = vunpack.c.h.b16 %v378
        %v524 = vunpack.c.l.b16 %v379
        %v525 = vunpack.c.h.b16 %v379
        %v526 = vunpack.c.l.b16 %v380
        %v527 = vunpack.c.h.b16 %v380
        %v528 = vunpack.c.l.b16 %v381
        %v529 = vunpack.c.h.b16 %v381
        %v530 = vunpack.c.l.b16 %v382
        %v531 = vunpack.c.h.b16 %v382
        %v532 = vunpack.c.l.b16 %v383
        %v533 = vunpack.c.h.b16 %v383
        %v534 = vunpack.c.l.b16 %v384
        %v535 = vunpack.c.h.b16 %v384
        %v536 = vunpack.c.l.b16 %v385
        %v537 = vunpack.c.h.b16 %v385
        %v538 = vunpack.c.l.b16 %v386
        %v539 = vunpack.c.h.b16 %v386
        %v540 = vunpack.c.l.b16 %v387
        %v541 = vunpack.c.h.b16 %v387
        %v542 = vunpack.c.l.b16 %v388
        %v543 = vunpack.c.h.b16 %v388
        %v544 = vunpack.c.l.b16 %v389
        %v545 = vunpack.c.h.b16 %v389
        %v546 = vpack.c.b16 %v452, %v450
        %v547 = vpack.c.b16 %v453, %v451
        %v548 = vpack.c.b16 %v456, %v454
        %v549 = vpack.c.b16 %v457, %v455
        %v550 = vpack.c.b16 %v460, %v458
        %v551 = vpack.c.b16 %v461, %v459
        %v552 = vpack.c.b16 %v464, %v462
        %v553 = vpack.c.b16 %v465, %v463
        %v554 = vpack.c.b16 %v468, %v466
        %v555 = vpack.c.b16 %v469, %v467
        %v556 = vpack.c.b16 %v472, %v470
        %v557 = vpack.c.b16 %v473, %v471
        %v558 = vpack.c.b16 %v476, %v474
        %v559 = vpack.c.b16 %v477, %v475
        %v560 = vpack.c.b16 %v480, %v478
        %v561 = vpack.c.b16 %v481, %v479
        %v562 = vpack.c.b16 %v484, %v482
        %v563 = vpack.c.b16 %v485, %v483
        %v564 = vpack.c.b16 %v488, %v486
        %v565 = vpack.c.b16 %v489, %v487
        %v566 = vpack.c.b16 %v492, %v490
        %v567 = vpack.c.b16 %v493, %v491
        %v568 = vpack.c.b16 %v496, %v494
        %v569 = vpack.c.b16 %v497, %v495
        %v570 = vpack.c.b16 %v500, %v498
        %v571 = vpack.c.b16 %v501, %v499
        %v572 = vpack.c.b16 %v504, %v502
        %v573 = vpack.c.b16 %v505, %v503
        %v574 = vpack.c.b16 %v508, %v506
        %v575 = vpack.c.b16 %v509, %v507
        %v576 = vpack.c.b16 %v512, %v510
        %v577 = vpack.c.b16 %v513, %v511
        %v578 = vpack.c.b16 %v516, %v514
        %v579 = vpack.c.b16 %v517, %v515
        %v580 = vpack.c.b16 %v520, %v518
        %v581 = vpack.c.b16 %v521, %v519
        %v582 = vpack.c.b16 %v524, %v522
        %v583 = vpack.c.b16 %v525, %v523
        %v584 = vpack.c.b16 %v528, %v526
        %v585 = vpack.c.b16 %v529, %v527
        %v586 = vpack.c.b16 %v532, %v530
        %v587 = vpack.c.b16 %v533, %v531
        %v588 = vpack.c.b16 %v536, %v534
        %v589 = vpack.c.b16 %v537, %v535
        %v590 = vpack.c.b16 %v540, %v538
        %v591 = vpack.c.b16 %v541, %v539
        %v592 = vpack.c.b16 %v544, %v542
        %v593 = vpack.c.b16 %v545, %v543
        %642 = vmatprep.subr.bf16.mxu0 %v547
        %643 = vmatpush1.bf16.msra.mxu0 %v546
        %644 = vmatprep.subr.bf16.mxu0 %v549
        %645 = vmatpush1.bf16.msra.mxu0 %v548
        %646 = vmatprep.subr.bf16.mxu0 %v551
        %647 = vmatpush1.bf16.msra.mxu0 %v550
        %648 = vmatprep.subr.bf16.mxu0 %v553
        %649 = vmatpush1.bf16.msra.mxu0 %v552
        %650 = vmatprep.subr.bf16.mxu0 %v555
        %651 = vmatpush1.bf16.msra.mxu0 %v554
        %652 = vmatprep.subr.bf16.mxu0 %v557
        %653 = vmatpush1.bf16.msra.mxu0 %v556
        %654 = vmatprep.subr.bf16.mxu0 %v559
        %655 = vmatpush1.bf16.msra.mxu0 %v558
        %656 = vmatprep.subr.bf16.mxu0 %v561
        %657 = vmatpush1.bf16.msra.mxu0 %v560
        %658 = vmatprep.subr.bf16.mxu0 %v563
        %659 = vmatpush1.bf16.msra.mxu0 %v562
        %660 = vmatprep.subr.bf16.mxu0 %v565
        %661 = vmatpush1.bf16.msra.mxu0 %v564
        %662 = vmatprep.subr.bf16.mxu0 %v567
        %663 = vmatpush1.bf16.msra.mxu0 %v566
        %664 = vmatprep.subr.bf16.mxu0 %v569
        %665 = vmatpush1.bf16.msra.mxu0 %v568
        %666 = vmatprep.subr.bf16.mxu0 %v571
        %667 = vmatpush1.bf16.msra.mxu0 %v570
        %668 = vmatprep.subr.bf16.mxu0 %v573
        %669 = vmatpush1.bf16.msra.mxu0 %v572
        %670 = vmatprep.subr.bf16.mxu0 %v575
        %671 = vmatpush1.bf16.msra.mxu0 %v574
        %672 = vmatprep.subr.bf16.mxu0 %v577
        %673 = vmatpush1.bf16.msra.mxu0 %v576
        %674 = vmatprep.mubr.bf16.mxu0 %v331
        %675 = vmatmul.mubr.bf16.gmra.mrb[0].mxu0 %v330
        %v676 = vpop.f32.mrb[0].mxu0
        %v677 = vadd.f32 %v395, %v676
        %v678 = vpop.f32.mrb[0].mxu0
        %v679 = vadd.f32 %v399, %v678
        %v680 = vpop.f32.mrb[0].mxu0
        %v681 = vadd.f32 %v395, %v680
        %v682 = vpop.f32.mrb[0].mxu0
        %v683 = vadd.f32 %v399, %v682
        %684 = vmatprep.mubr.bf16.mxu0 %v334
        %685 = vmatmul.mubr.bf16.gmra.mrb[0].mxu0 %v333
        %v686 = vpop.f32.mrb[0].mxu0
        %v687 = vadd.f32 %v395, %v686
        %v688 = vpop.f32.mrb[0].mxu0
        %v689 = vadd.f32 %v399, %v688
        %v690 = vpop.f32.mrb[0].mxu0
        %v691 = vadd.f32 %v395, %v690
        %v692 = vpop.f32.mrb[0].mxu0
        %v693 = vadd.f32 %v399, %v692
        %694 = vmatprep.mubr.bf16.mxu0 %v337
        %695 = vmatmul.mubr.bf16.gmra.mrb[0].mxu0 %v336
        %v696 = vpop.f32.mrb[0].mxu0
        %v697 = vadd.f32 %v395, %v696
        %v698 = vpop.f32.mrb[0].mxu0
        %v699 = vadd.f32 %v399, %v698
        %v700 = vpop.f32.mrb[0].mxu0
        %v701 = vadd.f32 %v395, %v700
        %v702 = vpop.f32.mrb[0].mxu0
        %v703 = vadd.f32 %v399, %v702
        %704 = vmatprep.mubr.bf16.mxu0 %v340
        %705 = vmatmul.mubr.bf16.gmra.mrb[0].mxu0 %v339
        %v706 = vpop.f32.mrb[0].mxu0
        %v707 = vadd.f32 %v395, %v706
        %v708 = vpop.f32.mrb[0].mxu0
        %v709 = vadd.f32 %v399, %v708
        %v710 = vpop.f32.mrb[0].mxu0
        %v711 = vadd.f32 %v395, %v710
        %v712 = vpop.f32.mrb[0].mxu0
        %v713 = vadd.f32 %v399, %v712
        %714 = vdwg.mxu0
        %715 = vmatprep.subr.bf16.mxu0 %v579
        %716 = vmatpush1.bf16.msra.mxu0 %v578
        %717 = vmatprep.subr.bf16.mxu0 %v581
        %718 = vmatpush1.bf16.msra.mxu0 %v580
        %719 = vmatprep.subr.bf16.mxu0 %v583
        %720 = vmatpush1.bf16.msra.mxu0 %v582
        %721 = vmatprep.subr.bf16.mxu0 %v585
        %722 = vmatpush1.bf16.msra.mxu0 %v584
        %723 = vmatprep.subr.bf16.mxu0 %v587
        %724 = vmatpush1.bf16.msra.mxu0 %v586
        %725 = vmatprep.subr.bf16.mxu0 %v589
        %726 = vmatpush1.bf16.msra.mxu0 %v588
        %727 = vmatprep.subr.bf16.mxu0 %v591
        %728 = vmatpush1.bf16.msra.mxu0 %v590
        %729 = vmatprep.subr.bf16.mxu0 %v593
        %730 = vmatpush1.bf16.msra.mxu0 %v592
        %731 = vmatprep.subr.bf16.mxu0 0
        %732 = vmatpush1.bf16.msra.mxu0 0
        %733 = vmatprep.subr.bf16.mxu0 0
        %734 = vmatpush1.bf16.msra.mxu0 0
        %735 = vmatprep.subr.bf16.mxu0 0
        %736 = vmatpush1.bf16.msra.mxu0 0
        %737 = vmatprep.subr.bf16.mxu0 0
        %738 = vmatpush1.bf16.msra.mxu0 0
        %739 = vmatprep.subr.bf16.mxu0 0
        %740 = vmatpush1.bf16.msra.mxu0 0
        %741 = vmatprep.subr.bf16.mxu0 0
        %742 = vmatpush1.bf16.msra.mxu0 0
        %743 = vmatprep.subr.bf16.mxu0 0
        %744 = vmatpush1.bf16.msra.mxu0 0
        %745 = vmatprep.subr.bf16.mxu0 0
        %746 = vmatpush1.bf16.msra.mxu0 0
        %747 = vmatprep.mubr.bf16.mxu0 0
        %748 = vmatmul.mubr.bf16.gmra.mrb[0].mxu0 %v332
        %v749 = vpop.f32.mrb[0].mxu0
        %v750 = vadd.f32 %v677, %v749
        %v751 = vpop.f32.mrb[0].mxu0
        %v752 = vadd.f32 %v679, %v751
        %v753 = vpop.f32.mrb[0].mxu0
        %v754 = vadd.f32 %v681, %v753
        %v755 = vpop.f32.mrb[0].mxu0
        %v756 = vadd.f32 %v683, %v755
        %757 = vmatprep.mubr.bf16.mxu0 0
        %758 = vmatmul.mubr.bf16.gmra.mrb[0].mxu0 %v335
        %v759 = vpop.f32.mrb[0].mxu0
        %v760 = vadd.f32 %v687, %v759
        %v761 = vpop.f32.mrb[0].mxu0
        %v762 = vadd.f32 %v689, %v761
        %v763 = vpop.f32.mrb[0].mxu0
        %v764 = vadd.f32 %v691, %v763
        %v765 = vpop.f32.mrb[0].mxu0
        %v766 = vadd.f32 %v693, %v765
        %767 = vmatprep.mubr.bf16.mxu0 0
        %768 = vmatmul.mubr.bf16.gmra.mrb[0].mxu0 %v338
        %v769 = vpop.f32.mrb[0].mxu0
        %v770 = vadd.f32 %v697, %v769
        %v771 = vpop.f32.mrb[0].mxu0
        %v772 = vadd.f32 %v699, %v771
        %v773 = vpop.f32.mrb[0].mxu0
        %v774 = vadd.f32 %v701, %v773
        %v775 = vpop.f32.mrb[0].mxu0
        %v776 = vadd.f32 %v703, %v775
        %777 = vmatprep.mubr.bf16.mxu0 0
        %778 = vmatmul.mubr.bf16.gmra.mrb[0].mxu0 %v341
        %v779 = vpop.f32.mrb[0].mxu0
        %v780 = vadd.f32 %v707, %v779
        %v781 = vpop.f32.mrb[0].mxu0
        %v782 = vadd.f32 %v709, %v781
        %v783 = vpop.f32.mrb[0].mxu0
        %v784 = vadd.f32 %v711, %v783
        %v785 = vpop.f32.mrb[0].mxu0
        %v786 = vadd.f32 %v713, %v785
        %787 = vdwg.mxu0
        %s788 = smul.u32 %s24, 64
        %s789 = scalar_lea.vmem [#allocation2], %s788
        %v790 = vld [vmem:[%s789] sm:$0xff]
        %v791 = vld [vmem:[%s789 + $0x8] sm:$0xff]
        %v792 = vld [vmem:[%s789 + $0x10] sm:$0xff]
        %v793 = vld [vmem:[%s789 + $0x18] sm:$0xff]
        %v794 = vld [vmem:[%s789 + $0x20] sm:$0xff]
        %v795 = vld [vmem:[%s789 + $0x28] sm:$0xff]
        %v796 = vld [vmem:[%s789 + $0x30] sm:$0xff]
        %v797 = vld [vmem:[%s789 + $0x38] sm:$0xff]
        %v798 = vtanh.pop %v750
        %v799 = vtanh.pop %v754
        %v800 = vtanh.pop %v760
        %v801 = vtanh.pop %v764
        %v802 = vtanh.pop %v770
        %v803 = vtanh.pop %v774
        %v804 = vtanh.pop %v780
        %v805 = vtanh.pop %v784
        %v806 = vxor.u32 %v752, 2147483648
        %v807 = vxor.u32 %v756, 2147483648
        %v808 = vxor.u32 %v762, 2147483648
        %v809 = vxor.u32 %v766, 2147483648
        %v810 = vxor.u32 %v772, 2147483648
        %v811 = vxor.u32 %v776, 2147483648
        %v812 = vxor.u32 %v782, 2147483648
        %v813 = vxor.u32 %v786, 2147483648
        %v814 = vmul.f32 %v806, 1.442695
        %v815 = vpow.pop %v814
        %v816 = vmul.f32 %v807, 1.442695
        %v817 = vpow.pop %v816
        %v818 = vmul.f32 %v808, 1.442695
        %v819 = vpow.pop %v818
        %v820 = vmul.f32 %v809, 1.442695
        %v821 = vpow.pop %v820
        %v822 = vmul.f32 %v810, 1.442695
        %v823 = vpow.pop %v822
        %v824 = vmul.f32 %v811, 1.442695
        %v825 = vpow.pop %v824
        %v826 = vmul.f32 %v812, 1.442695
        %v827 = vpow.pop %v826
        %v828 = vmul.f32 %v813, 1.442695
        %v829 = vpow.pop %v828
        %v830 = vadd.f32 %v815, 1.0
        %v831 = vadd.f32 %v817, 1.0
        %v832 = vadd.f32 %v819, 1.0
        %v833 = vadd.f32 %v821, 1.0
        %v834 = vadd.f32 %v823, 1.0
        %v835 = vadd.f32 %v825, 1.0
        %v836 = vadd.f32 %v827, 1.0
        %v837 = vadd.f32 %v829, 1.0
        %v838 = vrcp.pop %v830
        %v839 = vmul.f32 1.0, %v838
        %v840 = vrcp.pop %v831
        %v841 = vmul.f32 1.0, %v840
        %v842 = vrcp.pop %v832
        %v843 = vmul.f32 1.0, %v842
        %v844 = vrcp.pop %v833
        %v845 = vmul.f32 1.0, %v844
        %v846 = vrcp.pop %v834
        %v847 = vmul.f32 1.0, %v846
        %v848 = vrcp.pop %v835
        %v849 = vmul.f32 1.0, %v848
        %v850 = vrcp.pop %v836
        %v851 = vmul.f32 1.0, %v850
        %v852 = vrcp.pop %v837
        %v853 = vmul.f32 1.0, %v852
        %v854 = vmul.f32 %v798, %v839
        %v855 = vmul.f32 %v799, %v841
        %v856 = vmul.f32 %v800, %v843
        %v857 = vmul.f32 %v801, %v845
        %v858 = vmul.f32 %v802, %v847
        %v859 = vmul.f32 %v803, %v849
        %v860 = vmul.f32 %v804, %v851
        %v861 = vmul.f32 %v805, %v853
        %v862 = vadd.f32 %v790, %v854
        %v863 = vadd.f32 %v791, %v855
        %v864 = vadd.f32 %v792, %v856
        %v865 = vadd.f32 %v793, %v857
        %v866 = vadd.f32 %v794, %v858
        %v867 = vadd.f32 %v795, %v859
        %v868 = vadd.f32 %v796, %v860
        %v869 = vadd.f32 %v797, %v861
        %870 = vst [vmem:[%s789] sm:$0xff] %v862
        %871 = vst [vmem:[%s789 + $0x8] sm:$0xff] %v863
        %872 = vst [vmem:[%s789 + $0x10] sm:$0xff] %v864
        %873 = vst [vmem:[%s789 + $0x18] sm:$0xff] %v865
        %874 = vst [vmem:[%s789 + $0x20] sm:$0xff] %v866
        %875 = vst [vmem:[%s789 + $0x28] sm:$0xff] %v867
        %876 = vst [vmem:[%s789 + $0x30] sm:$0xff] %v868
        %877 = vst [vmem:[%s789 + $0x38] sm:$0xff] %v869
        %p878 = scmp.eq.s32.totalorder %s23, 8
        // Predicated region
        $region50: #{tpu_custom_call.1} parent=27 // pred_check
          %p879 = pneg %p878
        $region51: #{tpu_custom_call.1} parent=27 // pred_check_branch
          %881 = sbr.rel (%p879) target = $region53
        $region52: #{tpu_custom_call.1} parent=27 // pred_region
          $region54: #{tpu_custom_call.1} parent=52
            #allocation13 [shape = 's32[1]{0}', space=sflag, size = 0x4, scoped, tag = 'scoped memory for tpu_custom_call.1']
            %s882 = smul.addr %s788, 16
            %s883 = scalar_lea.hbm %s3, %s882
            // Predicated region
            $region55: #{tpu_custom_call.1} parent=54 // pred_check
              _
            $region56: #{tpu_custom_call.1} parent=54 // pred_check_branch
              %885 = sbr.rel target = $region58
            $region57: #{tpu_custom_call.1} parent=54 // pred_region
              %886 = sst [smem:[#allocation11]] [#allocation15]
              %887 = sst [smem:[#allocation12]] [#allocation14]
            $region58: #{tpu_custom_call.1} parent=54 // pred_fallthru
              _
            %889 = shalt.err (0)
            %s891 = sshll.u32 %s789, 4
            %s892 = int_to_ptr.vmem [resolvable:$true] %s891
            %894 = dma.vmem_to_hbm [thread:$0]  %s892, 1024, %s883, [#allocation13]
            %s895 = smul.u32 64, 1
            %s896 = sshll.u32 %s895, 4
            %897 = dma.done [#allocation13], %s896
        $region53: #{tpu_custom_call.1} parent=27 // pred_fallthru
          _
      $region28: #{tpu_custom_call.1} parent=5 // pred_fallthru
        _
    $region6: #{tpu_custom_call.1} parent=1 // loop_footer
      %s19 = sadd.s32 1, %s15
    $region7: #{tpu_custom_call.1} parent=1 // loop_footer_branch
      %14 = sbr.rel target = $region3
    $region8: #{tpu_custom_call.1} parent=1 // loop_exit
      _
    %898 = vsyncpa [#allocation5], 1
    %s899 = scalar_lea.sflag [#allocation5], 1
    %900 = vsyncpa %s899, 1
    %901 = vsyncpa [#allocation7], 1
    %s902 = scalar_lea.sflag [#allocation7], 1
    %903 = vsyncpa %s902, 1

</llo_original>
